<compile_context>
chip_gen: v6e
topology: v6e:2x2x1
jax: 0.10.0
libtpu: 0.0.40
codegen_flags: <defaults>
</compile_context>

<pallas_src>
import functools

import jax
import jax.numpy as jnp
import numpy as np
from jax.experimental import pallas as pl
from jax.experimental.pallas import tpu as pltpu


# --------------------------------------------------------------------------
# Kernels
# --------------------------------------------------------------------------
def _batch_mean_kernel(x_ref, o_ref, acc_ref, *, n_total, tile_n):
    """Per-batch channel mean over the flattened spatial axis.

    x_ref:   (1, C, TN)  input tile
    o_ref:   (1, C, 1)   per-batch mean (written on last N step)
    acc_ref: (C, 1)      f32 running sum (scratch, resident across N steps)
    """
    n = pl.program_id(1)

    @pl.when(n == 0)
    def _init():
        acc_ref[...] = jnp.zeros_like(acc_ref)

    x = x_ref[0].astype(jnp.float32)                       # (C, TN)
    if n_total % tile_n != 0:                              # static: mask stale tail
        lane = jax.lax.broadcasted_iota(jnp.int32, x.shape, 1)
        x = jnp.where(lane < (n_total - n * tile_n), x, 0.0)
    acc_ref[...] += jnp.sum(x, axis=-1, keepdims=True)

    @pl.when(n == pl.num_programs(1) - 1)
    def _finalize():
        o_ref[0] = acc_ref[...] * (1.0 / n_total)


def _tri_scan_kernel(w_ref, b_ref, x_ref, o_ref, *, operand_dtype):
    """One (batch, spatial-tile) step: gated projection as a single matmul.

    w_ref: (1, C3, C)    gate-folded effective weight (resident over N axis)
    b_ref: (1, C3, 128)  effective bias, lane-dense (value replicated on lanes)
    x_ref: (1, C, TN)    input tile
    o_ref: (1, C3, TN)   output tile
    """
    w = w_ref[0]                                           # already operand_dtype
    x = x_ref[0].astype(operand_dtype)                     # in-VMEM cast (no HBM pass)
    y = jnp.dot(w, x, preferred_element_type=jnp.float32)  # MXU, f32 accumulate
    o_ref[0] = (y + b_ref[0, :, :1]).astype(o_ref.dtype)


# --------------------------------------------------------------------------
# Wrapper helpers
# --------------------------------------------------------------------------
def _vmem_capacity_bytes():
    try:
        return int(pltpu.get_tpu_info().vmem_capacity_bytes)
    except Exception:  # pragma: no cover - conservative fallback (v7x per-TC)
        return 64 << 20


def _select_tile_n(n, batch, bytes_per_lane, budget_bytes, min_steps=4):
    """Largest lane-aligned tile within the VMEM budget, keeping >= min_steps
    total grid steps and preferring a tile that divides n exactly."""
    n_lane = pl.cdiv(n, 128) * 128
    tn = max(128, min(n_lane, (budget_bytes // max(bytes_per_lane, 1)) // 128 * 128))
    # Keep enough grid steps for megacore / dual-TC sharding.
    while tn > 128 and batch * pl.cdiv(n, tn) < min_steps:
        tn = max(128, (tn // 2) // 128 * 128)
    # Prefer lane-dense stores on every step (tn | n), without shrinking > 2x.
    if n % 128 == 0 and n % tn != 0:
        t = tn
        while t > tn // 2 and n % t != 0:
            t -= 128
        if t > tn // 2:
            tn = t
    return tn


# --------------------------------------------------------------------------
# Public entry point
# --------------------------------------------------------------------------
def tri_directional_scanner(x, params, *, compute_dtype=None):
    """x: (B, C, D, H, W) -> (B, C//3, D, H, W)."""
    B, C, D, H, W = x.shape
    assert C % 3 == 0, "dim must be divisible by 3"
    C3 = C // 3
    N = D * H * W
    out_dtype = x.dtype
    in_dtype = jnp.dtype(x.dtype)
    operand_dtype = jnp.dtype(compute_dtype) if compute_dtype is not None else in_dtype

    # Flattened spatial view — no pad, no dtype cast, no extra HBM pass.
    x_flat = x.reshape(B, C, N)

    # ---- generation-aware tile sizing / VMEM limits ----
    capacity = _vmem_capacity_bytes()
    tile_budget = (capacity * 45) // 100
    bytes_per_lane = 2 * (C * in_dtype.itemsize                    # x tile, dbl-buffered
                          + C3 * jnp.dtype(out_dtype).itemsize)    # out tile, dbl-buffered
    tn = _select_tile_n(N, B, bytes_per_lane, tile_budget)
    grid_n = pl.cdiv(N, tn)

    tile_bytes = tn * (C * in_dtype.itemsize + C3 * jnp.dtype(out_dtype).itemsize)
    w_bytes = C3 * C * operand_dtype.itemsize + C3 * 128 * 4
    vmem_limit = int(min(max(2 * (tile_bytes + w_bytes) + (2 << 20), 8 << 20),
                         (capacity * 3) // 4))

    # ---- pass 1: gating mean over spatial dims (Pallas reduction) ----
    sums = pl.pallas_call(
        functools.partial(_batch_mean_kernel, n_total=N, tile_n=tn),
        out_shape=jax.ShapeDtypeStruct((B, C, 1), jnp.float32),
        grid_spec=pltpu.PrefetchScalarGridSpec(
            num_scalar_prefetch=0,
            grid=(B, grid_n),
            in_specs=[pl.BlockSpec((1, C, tn), lambda b, n: (b, 0, n))],
            out_specs=pl.BlockSpec((1, C, 1), lambda b, n: (b, 0, 0)),
            scratch_shapes=[pltpu.VMEM((C, 1), jnp.float32)],
        ),
        compiler_params=pltpu.CompilerParams(
            dimension_semantics=("parallel", "arbitrary"),
            vmem_limit_bytes=vmem_limit,
        ),
        cost_estimate=pl.CostEstimate(
            flops=B * C * N,
            transcendentals=0,
            bytes_accessed=B * C * N * in_dtype.itemsize + B * C * 4,
        ),
    )(x_flat)
    xm = sums[:, :, 0]                                                 # (B, C) f32

    # ---- tiny gating head + gate folding (plain JAX, O(B*C)) ----
    logits = xm @ params["wg"].T.astype(jnp.float32) + params["bg"].astype(jnp.float32)
    gates = jax.nn.softmax(logits, axis=-1)                            # (B, 3)

    w_stack = jnp.stack([params["wx"], params["wy"], params["wz"]], 0)  # (3, C3, C)
    b_stack = jnp.stack([params["bx"], params["by"], params["bz"]], 0)  # (3, C3)
    w_eff = jnp.einsum("bk,koc->boc", gates,
                       w_stack.astype(jnp.float32)).astype(operand_dtype)   # (B, C3, C)
    b_eff = jnp.einsum("bk,ko->bo", gates, b_stack.astype(jnp.float32))      # (B, C3)
    b_eff = jnp.broadcast_to(b_eff[:, :, None], (B, C3, 128)).astype(jnp.float32)

    # ---- pass 2: gated projection (one matmul per tile) ----
    out = pl.pallas_call(
        functools.partial(_tri_scan_kernel, operand_dtype=operand_dtype),
        out_shape=jax.ShapeDtypeStruct((B, C3, N), out_dtype),
        grid_spec=pltpu.PrefetchScalarGridSpec(
            num_scalar_prefetch=0,
            grid=(B, grid_n),                       # N innermost: W_eff resident per batch
            in_specs=[
                pl.BlockSpec((1, C3, C), lambda b, n: (b, 0, 0)),      # W_eff
                pl.BlockSpec((1, C3, 128), lambda b, n: (b, 0, 0)),    # bias (lane-dense)
                pl.BlockSpec((1, C, tn), lambda b, n: (b, 0, n)),      # x tile
            ],
            out_specs=pl.BlockSpec((1, C3, tn), lambda b, n: (b, 0, n)),
        ),
        compiler_params=pltpu.CompilerParams(
            dimension_semantics=("parallel", "parallel"),
            vmem_limit_bytes=vmem_limit,
        ),
        cost_estimate=pl.CostEstimate(
            flops=2 * B * C3 * C * N,
            transcendentals=0,
            bytes_accessed=(B * N * (C * in_dtype.itemsize
                                     + C3 * jnp.dtype(out_dtype).itemsize)
                            + B * C3 * (C * operand_dtype.itemsize + 128 * 4)),
        ),
    )(w_eff, b_eff, x_flat)

    return out.reshape(B, C3, D, H, W)


# --------------------------------------------------------------------------
# Pure-JAX reference (intended semantics)
# --------------------------------------------------------------------------
def tri_directional_scanner_ref(x, params):
    B, C, D, H, W = x.shape
    C3 = C // 3
    xm = jnp.mean(x, axis=(2, 3, 4))                                    # (B, C)
    logits = xm @ params["wg"].T + params["bg"]                         # (B, 3)
    gates = jax.nn.softmax(logits, axis=1)                              # (B, 3)

    def proj(w, b):
        return jnp.einsum("oc,bcdhw->bodhw", w, x) + b.reshape(1, C3, 1, 1, 1)

    yx = proj(params["wx"], params["bx"])
    yy = proj(params["wy"], params["by"])
    yz = proj(params["wz"], params["bz"])
    g = gates.reshape(B, 3, 1, 1, 1)
    return g[:, 0:1] * yx + g[:, 1:2] * yy + g[:, 2:3] * yz


def init_params(key, dim):
    """Deterministic synthetic parameters matching the module's __init__ shapes."""
    c3 = dim // 3
    ks = jax.random.split(key, 8)
    s = 0.1
    return {
        "wx": s * jax.random.normal(ks[0], (c3, dim), jnp.float32),  # Conv3d(dim, dim//3, 1)
        "bx": s * jax.random.normal(ks[1], (c3,), jnp.float32),
        "wy": s * jax.random.normal(ks[2], (c3, dim), jnp.float32),
        "by": s * jax.random.normal(ks[3], (c3,), jnp.float32),
        "wz": s * jax.random.normal(ks[4], (c3, dim), jnp.float32),
        "bz": s * jax.random.normal(ks[5], (c3,), jnp.float32),
        "wg": s * jax.random.normal(ks[6], (3, dim), jnp.float32),   # Conv3d(dim, 3, 1)
        "bg": s * jax.random.normal(ks[7], (3,), jnp.float32),
    }


if __name__ == "__main__":
    # dim divisible by 3; C=24 / C3=8 sublane-aligned, N = 16^3 = 4096.
    B, dim, D, H, W = 2, 24, 16, 16, 16
    key = jax.random.PRNGKey(0)
    kx, kp = jax.random.split(key)
    x = jax.random.normal(kx, (B, dim, D, H, W), jnp.float32)
    params = init_params(kp, dim)

    ref = jax.block_until_ready(tri_directional_scanner_ref(x, params))

    # f32 path (exact-ish).
    out = jax.block_until_ready(tri_directional_scanner(x, params))
    assert out.shape == (B, dim // 3, D, H, W), out.shape
    np.testing.assert_allclose(np.asarray(out), np.asarray(ref),
                               rtol=1e-4, atol=1e-4)

    # bf16-operand / f32-accumulate path (MXU-friendly on v5e/v6e), loose tol.
    out_bf16 = jax.block_until_ready(
        tri_directional_scanner(x, params, compute_dtype=jnp.bfloat16))
    np.testing.assert_allclose(np.asarray(out_bf16), np.asarray(ref),
                               rtol=5e-2, atol=5e-2)

    print("KERNEL_OK")
</pallas_src>

<mosaic_0001>
module attributes {stable_mosaic.version = 11 : i64} {
  func.func @_batch_mean_kernel(%arg0: i32, %arg1: i32, %arg2: memref<1x24x2048xf32, #tpu.memory_space<vmem>>, %arg3: memref<1x24x1xf32, #tpu.memory_space<vmem>>, %arg4: memref<24x1xf32, #tpu.memory_space<vmem>>) attributes {dimension_semantics = [#tpu.dimension_semantics<parallel>, #tpu.dimension_semantics<arbitrary>], iteration_bounds = array<i64: 2, 2>, scalar_prefetch = 0 : i64, scratch_operands = 1 : i64, tpu.core_type = #tpu.core_type<tc>, window_params = [{transform_indices = @transform_0, window_bounds = array<i64: 1, 24, 2048>}, {transform_indices = @transform_1, window_bounds = array<i64: 1, 24, 1>}]} {
    %c0_i32 = arith.constant 0 : i32
    %0 = arith.cmpi eq, %arg1, %c0_i32 : i32
    %1 = arith.extui %0 : i1 to i32
    %c0_i32_0 = arith.constant 0 : i32
    %2 = arith.cmpi ne, %1, %c0_i32_0 : i32
    scf.if %2 {
      %cst_8 = arith.constant 0.000000e+00 : f32
      %13 = vector.broadcast %cst_8 : f32 to vector<24x1xf32>
      %c0_9 = arith.constant 0 : index
      %c0_10 = arith.constant 0 : index
      %14 = vector.load %arg4[%c0_9, %c0_10] : memref<24x1xf32, #tpu.memory_space<vmem>>, vector<24x1xf32>
      tpu.vector_store %arg4[%c0_9, %c0_10], %13 {strides = array<i32>} : memref<24x1xf32, #tpu.memory_space<vmem>>, vector<24x1xf32>,
    } else {
    }
    %c0 = arith.constant 0 : index
    %c0_1 = arith.constant 0 : index
    %c0_2 = arith.constant 0 : index
    %3 = vector.load %arg2[%c0, %c0_1, %c0_2] : memref<1x24x2048xf32, #tpu.memory_space<vmem>>, vector<1x24x2048xf32>
    %4 = vector.shape_cast %3 : vector<1x24x2048xf32> to vector<24x2048xf32>
    %c0_3 = arith.constant 0 : index
    %c0_4 = arith.constant 0 : index
    %5 = vector.load %arg4[%c0_3, %c0_4] : memref<24x1xf32, #tpu.memory_space<vmem>>, vector<24x1xf32>
    %cst = arith.constant dense<0.000000e+00> : vector<24xf32>
    %6 = vector.multi_reduction <add>, %4, %cst [1] : vector<24x2048xf32> to vector<24xf32>
    %7 = vector.shape_cast %6 : vector<24xf32> to vector<24x1xf32>
    %8 = arith.addf %5, %7 : vector<24x1xf32>
    %c0_5 = arith.constant 0 : index
    %c0_6 = arith.constant 0 : index
    %9 = vector.load %arg4[%c0_5, %c0_6] : memref<24x1xf32, #tpu.memory_space<vmem>>, vector<24x1xf32>
    tpu.vector_store %arg4[%c0_5, %c0_6], %8 {strides = array<i32>} : memref<24x1xf32, #tpu.memory_space<vmem>>, vector<24x1xf32>,
    %c1_i32 = arith.constant 1 : i32
    %10 = arith.cmpi eq, %arg1, %c1_i32 : i32
    %11 = arith.extui %10 : i1 to i32
    %c0_i32_7 = arith.constant 0 : i32
    %12 = arith.cmpi ne, %11, %c0_i32_7 : i32
    scf.if %12 {
      %c0_8 = arith.constant 0 : index
      %c0_9 = arith.constant 0 : index
      %13 = vector.load %arg4[%c0_8, %c0_9] : memref<24x1xf32, #tpu.memory_space<vmem>>, vector<24x1xf32>
      %cst_10 = arith.constant 2.44140625E-4 : f32
      %14 = vector.broadcast %cst_10 : f32 to vector<24x1xf32>
      %15 = arith.mulf %13, %14 : vector<24x1xf32>
      %c0_11 = arith.constant 0 : index
      %c0_12 = arith.constant 0 : index
      %c0_13 = arith.constant 0 : index
      %16 = vector.load %arg3[%c0_11, %c0_12, %c0_13] : memref<1x24x1xf32, #tpu.memory_space<vmem>>, vector<1x24x1xf32>
      %17 = vector.shape_cast %16 : vector<1x24x1xf32> to vector<24x1xf32>
      %18 = vector.shape_cast %15 : vector<24x1xf32> to vector<1x24x1xf32>
      tpu.vector_store %arg3[%c0_11, %c0_12, %c0_13], %18 {strides = array<i32>} : memref<1x24x1xf32, #tpu.memory_space<vmem>>, vector<1x24x1xf32>,
    } else {
    }
    return
  }
  func.func @transform_0(%arg0: i32, %arg1: i32) -> (i32, i32, i32) {
    %c0_i32 = arith.constant 0 : i32
    %c0_i32_0 = arith.constant 0 : i32
    return %arg0, %c0_i32, %arg1 : i32, i32, i32
  }
  func.func @transform_1(%arg0: i32, %arg1: i32) -> (i32, i32, i32) {
    %c0_i32 = arith.constant 0 : i32
    %c0_i32_0 = arith.constant 0 : i32
    %c0_i32_1 = arith.constant 0 : i32
    return %arg0, %c0_i32, %c0_i32_0 : i32, i32, i32
  }
}

</mosaic_0001>

<llo_original>
// kernel: tpu_custom_call.1
$region0: #{tpu_custom_call.1}
  #allocation0 [shape = 'u32[]', space=smem, size = 0x4, offset = 0x4, fixed_abs, tag = 'smem constant byte address 0x4 - core index']
  #allocation1 [shape = 'u32[144,128]{1,0:T(1,128)}', space=vmem, size = 0x12000, scoped, tag = 'internal scratch']
  #allocation2 [shape = 'f32[24,1]{1,0:T(8,128)}', space=vmem, size = 0x3000, scoped, tag = 'scratch operand']
  %s0 = inlined_call_operand.hbm [shape: f32[2,24,4096], index: 0, kind: input, shape index: {}]
  %s1 = inlined_call_operand.vmem [shape: f32[2,24,1], index: 1, kind: output, shape index: {}]
  %s2 = sld [smem:[#allocation0]]
  $region49: #{tpu_custom_call.1} parent=0
    _
  %s4 = ssub.s32 1, %s2
  %s5 = scalar_select 0, %s4, %s2
  $region1: #{tpu_custom_call.1} parent=0
    #allocation3 [shape = 'u8[393216]{0}', space=vmem, size = 0x60000, scoped, tag = 'input window, operand 0']
    #allocation4 [shape = 's32[2]{0}', space=sflag, size = 0x8, scoped, tag = 'scoped memory for tpu_custom_call.1']
    %6 = vsyncpa [#allocation4], 0
    %s7 = scalar_lea.sflag [#allocation4], 1
    %8 = vsyncpa %s7, 0
    loop: start=0, step=1, limit=6
    $region2: #{tpu_custom_call.1} parent=1 // loop_pre_header
      _
    $region3: #{tpu_custom_call.1} parent=1 // loop_header
      %s10 = sphi 0, %s14
      %p11 = scmp.ge.s32.totalorder %s10, 6
      %s17 = sphi 0, %s29
      %s18 = sphi 0, %s25
      %s19 = sphi 0, %s17
      %s20 = sphi 0, %s18
      %s21 = sphi 0, %s19
      %s22 = sphi 0, %s20
      %s34 = sphi 0, %s36
      %s37 = sphi 0, %s34
      %s38 = sphi 0, %s37
      %s54 = sphi 0, %s38
      %s60 = sphi 0, %s62
      %s63 = sphi 0, %s60
      %s64 = sphi 0, %s63
      %s80 = sphi 0, %s64
    $region4: #{tpu_custom_call.1} parent=1 // loop_header_branch
      %13 = sbr.rel (%p11) target = $region8
    $region5: #{tpu_custom_call.1} parent=1 // loop_body
      %s15 = ssub.s32 %s10, 1
      %s16 = ssub.s32 %s10, 2
      %s23 = sadd.s32 1, %s18
      %p24 = scmp.ge.s32.totalorder %s23, 2
      %s25 = scalar_select %p24, 0, %s23
      %s26 = sadd.s32 1, %s17
      %s27 = scalar_select %p24, %s26, %s17
      %p28 = scmp.ge.s32.totalorder %s27, 2
      %s29 = scalar_select %p28, 0, %s27
      %s30 = ssub.s32 %s17, %s29
      %s31 = ssub.s32 %s18, %s25
      %s32 = sor.u32 %s30, %s31
      %p33 = scmp.eq.s32.totalorder %s32, 0
      %s35 = sadd.s32 %s34, 1
      %s36 = scalar_select %p33, %s34, %s35
      %p39 = pneg %p33
      %p40 = scmp.eq.s32.totalorder %s10, 3
      %p41 = por %p39, %p40
      %p42 = scmp.ne.s32.totalorder %s34, %s37
      %p43 = scmp.eq.s32.totalorder %s10, 0
      %p44 = por %p42, %p43
      %p45 = scmp.ne.s32.totalorder %s34, %s37
      %p46 = scmp.eq.s32.totalorder %s15, 3
      %p47 = por %p45, %p46
      %p48 = scmp.ne.s32.totalorder %s37, %s38
      %p49 = scmp.eq.s32.totalorder %s15, 0
      %p50 = por %p48, %p49
      %p51 = scmp.ne.s32.totalorder %s37, %s38
      %p52 = scmp.eq.s32.totalorder %s16, 3
      %p53 = por %p51, %p52
      %p55 = scmp.ne.s32.totalorder %s38, %s54
      %p56 = scmp.eq.s32.totalorder %s16, 0
      %p57 = por %p55, %p56
      %s58 = ssub.s32 %s17, %s29
      %p59 = scmp.eq.s32.totalorder %s58, 0
      %s61 = sadd.s32 %s60, 1
      %s62 = scalar_select %p59, %s60, %s61
      %p65 = pneg %p59
      %p66 = scmp.eq.s32.totalorder %s10, 3
      %p67 = por %p65, %p66
      %p68 = scmp.ne.s32.totalorder %s60, %s63
      %p69 = scmp.eq.s32.totalorder %s10, 0
      %p70 = por %p68, %p69
      %p71 = scmp.ne.s32.totalorder %s60, %s63
      %p72 = scmp.eq.s32.totalorder %s15, 3
      %p73 = por %p71, %p72
      %p74 = scmp.ne.s32.totalorder %s63, %s64
      %p75 = scmp.eq.s32.totalorder %s15, 0
      %p76 = por %p74, %p75
      %p77 = scmp.ne.s32.totalorder %s63, %s64
      %p78 = scmp.eq.s32.totalorder %s16, 3
      %p79 = por %p77, %p78
      %p81 = scmp.ne.s32.totalorder %s64, %s80
      %p82 = scmp.eq.s32.totalorder %s16, 0
      %p83 = por %p81, %p82
      %p84 = scmp.le.s32.totalorder 1, %s10
      %p85 = scmp.lt.s32.totalorder %s10, 5
      %p86 = pnand %p84, %p85
      %p87 = pneg %p86
      // Predicated region
      $region9: #{tpu_custom_call.1} parent=5 // pred_check
        _
      $region10: #{tpu_custom_call.1} parent=5 // pred_check_branch
        %89 = sbr.rel (%p86) target = $region12
      $region11: #{tpu_custom_call.1} parent=5 // pred_region
        %s90 = ssub.s32 %s10, 1
      $region12: #{tpu_custom_call.1} parent=5 // pred_fallthru
        _
      %p91 = scmp.lt.s32.totalorder %s10, 4
      // Predicated region
      $region13: #{tpu_custom_call.1} parent=5 // pred_check
        %p92 = pneg %p91
      $region14: #{tpu_custom_call.1} parent=5 // pred_check_branch
        %94 = sbr.rel (%p92) target = $region16
      $region15: #{tpu_custom_call.1} parent=5 // pred_region
        // Predicated region
        $region17: #{tpu_custom_call.1} parent=15 // pred_check
          %p95 = pneg %p44
        $region18: #{tpu_custom_call.1} parent=15 // pred_check_branch
          %97 = sbr.rel (%p95) target = $region20
        $region19: #{tpu_custom_call.1} parent=15 // pred_region
          %s98 = sand.u32 %s34, 1
          %s99 = scalar_lea.sflag [#allocation4], %s98
          %s100 = sand.u32 %s34, 1
          %s101 = smul.addr %s100, 384
          %s102 = scalar_lea.vmem [#allocation3], %s101
          %s103 = smul.u32 16, %s18
          %s105 = ssub.s32 6144, 6144
          %106 = vsyncadd %s99, %s105
          %s107 = smul.addr %s17, 96
          %s108 = sadd.s32 %s103, %s107
          %s109 = smul.addr %s108, 128
          %s110 = scalar_lea.hbm %s0, %s109
          %s111 = sshll.u32 %s102, 4
          %s112 = int_to_ptr.vmem [resolvable:$true] %s111
          %117 = dma.hbm_to_vmem [thread:$0]  %s110, 6144, %s112, %s99, 4096, 2048, 128
        $region20: #{tpu_custom_call.1} parent=15 // pred_fallthru
          _
      $region16: #{tpu_custom_call.1} parent=5 // pred_fallthru
        _
      %p118 = scmp.le.s32.totalorder 1, %s10
      %p119 = scmp.lt.s32.totalorder %s10, 5
      %p120 = pnand %p118, %p119
      %p121 = pneg %p120
      // Predicated region
      $region21: #{tpu_custom_call.1} parent=5 // pred_check
        _
      $region22: #{tpu_custom_call.1} parent=5 // pred_check_branch
        %123 = sbr.rel (%p120) target = $region24
      $region23: #{tpu_custom_call.1} parent=5 // pred_region
        %s124 = ssub.s32 %s10, 1
        %s125 = sand.u32 %s37, 1
        %s126 = scalar_lea.sflag [#allocation4], %s125
        %s127 = sand.u32 %s37, 1
        %s128 = smul.addr %s127, 384
        %s129 = scalar_lea.vmem [#allocation3], %s128
        // Predicated region
        $region25: #{tpu_custom_call.1} parent=23 // pred_check
          %p130 = pneg %p50
        $region26: #{tpu_custom_call.1} parent=23 // pred_check_branch
          %132 = sbr.rel (%p130) target = $region28
        $region27: #{tpu_custom_call.1} parent=23 // pred_region
          %133 = dma.done %s126, 6144
        $region28: #{tpu_custom_call.1} parent=23 // pred_fallthru
          _
        %s134 = sand.u32 %s37, 1
        %s135 = scalar_lea.sflag [#allocation4], %s134
        %s136 = sand.u32 %s37, 1
        %s137 = smul.addr %s136, 384
        %s138 = scalar_lea.vmem [#allocation3], %s137
        %p139 = pneg %p50
        %p140 = pneg %p47
        %p141 = pneg %p76
        %p142 = pneg %p73
        %p143 = scmp.lt.s32.totalorder %s19, 1
        %s144 = scalar_select %p143, %s19, 1
        %s145 = smul.addr %s144, 3
        %s146 = smul.addr %s145, 8
        %s147 = scalar_lea.vmem %s1, %s146
        %s148 = smul.u32 16, %s20
        %p149 = scmp.lt.s32.totalorder %s19, 1
        %s150 = scalar_select %p149, %s19, 1
        %s151 = smul.addr %s150, 3
        %s152 = smul.addr %s151, 8
        %s153 = scalar_lea.vmem %s1, %s152
        %p154 = scmp.eq.s32.totalorder %s20, 0
        // Predicated region
        $region29: #{tpu_custom_call.1} parent=23 // pred_check
          %p155 = pneg %p154
        $region30: #{tpu_custom_call.1} parent=23 // pred_check_branch
          %157 = sbr.rel (%p155) target = $region32
        $region31: #{tpu_custom_call.1} parent=23 // pred_region
          %vm158 = vcmask 7168
          %159 = vst.msk [vmem:[#allocation2] sm:$0xff] %vm158, 0.0
          %160 = vst.msk [vmem:[#allocation2 + $0x8] sm:$0xff] %vm158, 0.0
          %161 = vst.msk [vmem:[#allocation2 + $0x10] sm:$0xff] %vm158, 0.0
        $region32: #{tpu_custom_call.1} parent=23 // pred_fallthru
          _
        %v162 = vld [vmem:[%s129] sm:$0xff]
        %v163 = vld [vmem:[%s129 + $0x8] sm:$0xff]
        %v164 = vld [vmem:[%s129 + $0x10] sm:$0xff]
        %v165 = vld [vmem:[%s129 + $0x18] sm:$0xff]
        %v166 = vld [vmem:[%s129 + $0x20] sm:$0xff]
        %v167 = vld [vmem:[%s129 + $0x28] sm:$0xff]
        %v168 = vld [vmem:[%s129 + $0x30] sm:$0xff]
        %v169 = vld [vmem:[%s129 + $0x38] sm:$0xff]
        %v170 = vld [vmem:[%s129 + $0x40] sm:$0xff]
        %v171 = vld [vmem:[%s129 + $0x48] sm:$0xff]
        %v172 = vld [vmem:[%s129 + $0x50] sm:$0xff]
        %v173 = vld [vmem:[%s129 + $0x58] sm:$0xff]
        %v174 = vld [vmem:[%s129 + $0x60] sm:$0xff]
        %v175 = vld [vmem:[%s129 + $0x68] sm:$0xff]
        %v176 = vld [vmem:[%s129 + $0x70] sm:$0xff]
        %v177 = vld [vmem:[%s129 + $0x78] sm:$0xff]
        %v178 = vld [vmem:[%s129 + $0x80] sm:$0xff]
        %v179 = vld [vmem:[%s129 + $0x88] sm:$0xff]
        %v180 = vld [vmem:[%s129 + $0x90] sm:$0xff]
        %v181 = vld [vmem:[%s129 + $0x98] sm:$0xff]
        %v182 = vld [vmem:[%s129 + $0xa0] sm:$0xff]
        %v183 = vld [vmem:[%s129 + $0xa8] sm:$0xff]
        %v184 = vld [vmem:[%s129 + $0xb0] sm:$0xff]
        %v185 = vld [vmem:[%s129 + $0xb8] sm:$0xff]
        %v186 = vld [vmem:[%s129 + $0xc0] sm:$0xff]
        %v187 = vld [vmem:[%s129 + $0xc8] sm:$0xff]
        %v188 = vld [vmem:[%s129 + $0xd0] sm:$0xff]
        %v189 = vld [vmem:[%s129 + $0xd8] sm:$0xff]
        %v190 = vld [vmem:[%s129 + $0xe0] sm:$0xff]
        %v191 = vld [vmem:[%s129 + $0xe8] sm:$0xff]
        %v192 = vld [vmem:[%s129 + $0xf0] sm:$0xff]
        %v193 = vld [vmem:[%s129 + $0xf8] sm:$0xff]
        %v194 = vld [vmem:[%s129 + $0x100] sm:$0xff]
        %v195 = vld [vmem:[%s129 + $0x108] sm:$0xff]
        %v196 = vld [vmem:[%s129 + $0x110] sm:$0xff]
        %v197 = vld [vmem:[%s129 + $0x118] sm:$0xff]
        %v198 = vld [vmem:[%s129 + $0x120] sm:$0xff]
        %v199 = vld [vmem:[%s129 + $0x128] sm:$0xff]
        %v200 = vld [vmem:[%s129 + $0x130] sm:$0xff]
        %v201 = vld [vmem:[%s129 + $0x138] sm:$0xff]
        %v202 = vld [vmem:[%s129 + $0x140] sm:$0xff]
        %v203 = vld [vmem:[%s129 + $0x148] sm:$0xff]
        %v204 = vld [vmem:[%s129 + $0x150] sm:$0xff]
        %v205 = vld [vmem:[%s129 + $0x158] sm:$0xff]
        %v206 = vld [vmem:[%s129 + $0x160] sm:$0xff]
        %v207 = vld [vmem:[%s129 + $0x168] sm:$0xff]
        %v208 = vld [vmem:[%s129 + $0x170] sm:$0xff]
        %v209 = vld [vmem:[%s129 + $0x178] sm:$0xff]
        %v210 = vld [vmem:[#allocation2] sm:$0xff]
        %v211 = vld [vmem:[#allocation2 + $0x8] sm:$0xff]
        %v212 = vld [vmem:[#allocation2 + $0x10] sm:$0xff]
        %v213 = vadd.f32 %v162, %v163
        %v214 = vadd.f32 %v213, %v164
        %v215 = vadd.f32 %v214, %v165
        %v216 = vadd.f32 %v215, %v166
        %v217 = vadd.f32 %v216, %v167
        %v218 = vadd.f32 %v217, %v168
        %v219 = vadd.f32 %v218, %v169
        %v220 = vadd.f32 %v219, %v170
        %v221 = vadd.f32 %v220, %v171
        %v222 = vadd.f32 %v221, %v172
        %v223 = vadd.f32 %v222, %v173
        %v224 = vadd.f32 %v223, %v174
        %v225 = vadd.f32 %v224, %v175
        %v226 = vadd.f32 %v225, %v176
        %v227 = vadd.f32 %v226, %v177
        %228 = vadd.xlane.f32.xlu0 %v227
        %v229 = vpop.xlane.xlu0 %228
        %v230 = vadd.f32 %v178, %v179
        %v231 = vadd.f32 %v230, %v180
        %v232 = vadd.f32 %v231, %v181
        %v233 = vadd.f32 %v232, %v182
        %v234 = vadd.f32 %v233, %v183
        %v235 = vadd.f32 %v234, %v184
        %v236 = vadd.f32 %v235, %v185
        %v237 = vadd.f32 %v236, %v186
        %v238 = vadd.f32 %v237, %v187
        %v239 = vadd.f32 %v238, %v188
        %v240 = vadd.f32 %v239, %v189
        %v241 = vadd.f32 %v240, %v190
        %v242 = vadd.f32 %v241, %v191
        %v243 = vadd.f32 %v242, %v192
        %v244 = vadd.f32 %v243, %v193
        %245 = vadd.xlane.f32.xlu0 %v244
        %v246 = vpop.xlane.xlu0 %245
        %v247 = vadd.f32 %v194, %v195
        %v248 = vadd.f32 %v247, %v196
        %v249 = vadd.f32 %v248, %v197
        %v250 = vadd.f32 %v249, %v198
        %v251 = vadd.f32 %v250, %v199
        %v252 = vadd.f32 %v251, %v200
        %v253 = vadd.f32 %v252, %v201
        %v254 = vadd.f32 %v253, %v202
        %v255 = vadd.f32 %v254, %v203
        %v256 = vadd.f32 %v255, %v204
        %v257 = vadd.f32 %v256, %v205
        %v258 = vadd.f32 %v257, %v206
        %v259 = vadd.f32 %v258, %v207
        %v260 = vadd.f32 %v259, %v208
        %v261 = vadd.f32 %v260, %v209
        %262 = vadd.xlane.f32.xlu0 %v261
        %v263 = vpop.xlane.xlu0 %262
        %v264 = vadd.f32 %v210, %v229
        %v265 = vadd.f32 %v211, %v246
        %v266 = vadd.f32 %v212, %v263
        %vm267 = vcmask 7168
        %268 = vst.msk [vmem:[#allocation2] sm:$0xff] %vm267, %v264
        %269 = vst.msk [vmem:[#allocation2 + $0x8] sm:$0xff] %vm267, %v265
        %270 = vst.msk [vmem:[#allocation2 + $0x10] sm:$0xff] %vm267, %v266
        %p271 = scmp.eq.s32.totalorder %s20, 1
        // Predicated region
        $region33: #{tpu_custom_call.1} parent=23 // pred_check
          %p272 = pneg %p271
        $region34: #{tpu_custom_call.1} parent=23 // pred_check_branch
          %274 = sbr.rel (%p272) target = $region36
        $region35: #{tpu_custom_call.1} parent=23 // pred_region
          %v275 = vld [vmem:[#allocation2] sm:$0xff]
          %v276 = vld [vmem:[#allocation2 + $0x8] sm:$0xff]
          %v277 = vld [vmem:[#allocation2 + $0x10] sm:$0xff]
          %v278 = vmul.f32 %v275, 0.00024414063
          %v279 = vmul.f32 %v276, 0.00024414063
          %v280 = vmul.f32 %v277, 0.00024414063
          %281 = vst.msk [vmem:[%s153] sm:$0xff] %vm267, %v278
          %282 = vst.msk [vmem:[%s153 + $0x8] sm:$0xff] %vm267, %v279
          %283 = vst.msk [vmem:[%s153 + $0x10] sm:$0xff] %vm267, %v280
        $region36: #{tpu_custom_call.1} parent=23 // pred_fallthru
          _
        %p284 = scmp.lt.s32.totalorder %s19, 1
        %s285 = scalar_select %p284, %s19, 1
        %s286 = smul.addr %s285, 3
        %s287 = smul.addr %s286, 8
        %s288 = scalar_lea.vmem %s1, %s287
        // Predicated region
        $region37: #{tpu_custom_call.1} parent=23 // pred_check
          %p289 = pneg %p73
        $region38: #{tpu_custom_call.1} parent=23 // pred_check_branch
          %291 = sbr.rel (%p289) target = $region40
        $region39: #{tpu_custom_call.1} parent=23 // pred_region
          _
        $region40: #{tpu_custom_call.1} parent=23 // pred_fallthru
          _
      $region24: #{tpu_custom_call.1} parent=5 // pred_fallthru
        _
      %p292 = scmp.le.s32.totalorder 2, %s10
      // Predicated region
      $region41: #{tpu_custom_call.1} parent=5 // pred_check
        %p293 = pneg %p292
      $region42: #{tpu_custom_call.1} parent=5 // pred_check_branch
        %295 = sbr.rel (%p293) target = $region44
      $region43: #{tpu_custom_call.1} parent=5 // pred_region
        %s296 = ssub.s32 %s10, 2
        // Predicated region
        $region45: #{tpu_custom_call.1} parent=43 // pred_check
          %p297 = pneg %p79
        $region46: #{tpu_custom_call.1} parent=43 // pred_check_branch
          %299 = sbr.rel (%p297) target = $region48
        $region47: #{tpu_custom_call.1} parent=43 // pred_region
          %p300 = scmp.lt.s32.totalorder %s21, 1
          %s301 = scalar_select %p300, %s21, 1
          %s302 = smul.addr %s301, 3
          %s303 = smul.addr %s302, 8
          %s304 = scalar_lea.vmem %s1, %s303
        $region48: #{tpu_custom_call.1} parent=43 // pred_fallthru
          _
      $region44: #{tpu_custom_call.1} parent=5 // pred_fallthru
        _
    $region6: #{tpu_custom_call.1} parent=1 // loop_footer
      %s14 = sadd.s32 1, %s10
    $region7: #{tpu_custom_call.1} parent=1 // loop_footer_branch
      %9 = sbr.rel target = $region3
    $region8: #{tpu_custom_call.1} parent=1 // loop_exit
      _
    %305 = vsyncpa [#allocation4], 1
    %s306 = scalar_lea.sflag [#allocation4], 1
    %307 = vsyncpa %s306, 1

</llo_original>
